<compile_context>
chip_gen: v6e
topology: v6e:2x2x1
jax: 0.10.0
libtpu: 0.0.40
codegen_flags: <defaults>
</compile_context>

<pallas_src>
import functools

import jax
import jax.numpy as jnp
from jax import lax
from jax.experimental import pallas as pl
from jax.experimental.pallas import tpu as pltpu


def _ntxent_kernel(q_ref, p_ref, kt_ref, loss_ref, acc_ref, *, batch_size, tq):
    """Processes one (tq, 2B) row-block of the NT-Xent loss."""
    N = 2 * batch_size
    pid = pl.program_id(0)
    g0 = pid * tq  # global row offset of this Q tile in [0, 2B)

    @pl.when(pid == 0)
    def _init():
        acc_ref[0] = jnp.float32(0.0)

    q = q_ref[...]                       # (tq, Dp) bf16, normalized * sqrt(1/T)
    p = p_ref[...]                       # (tq, Dp) bf16, positive partners

    # (tq, 2B) logits on the MXU: bf16 x bf16 -> f32; temperature already folded.
    logits = jnp.dot(q, kt_ref[...], preferred_element_type=jnp.float32)

    # positive logit for row r: row-wise dot with its partner (f32 accumulation)
    pos = jnp.sum(q.astype(jnp.float32) * p.astype(jnp.float32),
                  axis=-1, keepdims=True)                            # (tq, 1)

    # mask self-similarity only: global column == g0 + local row
    diag_col = g0 + lax.broadcasted_iota(jnp.int32, (tq, 1), 0)
    col = lax.broadcasted_iota(jnp.int32, (tq, N), 1)
    masked = jnp.where(col == diag_col, jnp.float32(-1e30), logits)

    # per-row cross-entropy with the positive as the label-0 logit:
    #   loss_row = logsumexp_{j != self} logits_j  -  pos
    m = jnp.max(masked, axis=-1, keepdims=True)
    lse = m + jnp.log(jnp.sum(jnp.exp(masked - m), axis=-1, keepdims=True))

    acc_ref[0] = acc_ref[0] + jnp.sum(lse - pos)

    @pl.when(pid == pl.num_programs(0) - 1)
    def _finalize():
        # CrossEntropyLoss(reduction='sum') / (2B), written exactly once
        loss_ref[0, 0] = acc_ref[0] / jnp.float32(N)


def _vmem_capacity_bytes():
    try:
        return int(pltpu.get_tpu_info().vmem_capacity_bytes)
    except Exception:
        return 64 * 1024 * 1024  # conservative (v7x per-TensorCore)


def _estimate_vmem(tq, N, Dp):
    resident_kt = Dp * N * 2                 # bf16 (Dp, 2B), single-buffered resident
    streamed = 2 * 2 * tq * Dp * 2           # Q + partner tiles, double-buffered bf16
    temps = 8 * tq * N * 4                   # logits + iota/mask/exp temporaries (f32/i32)
    return resident_kt + streamed + temps + (2 << 20)


def _pick_tile(B, N, Dp, budget):
    # Largest multiple-of-8 row tile that divides B and fits the VMEM budget.
    for t in (1024, 512, 256, 128, 64, 32, 16, 8):
        if B % t == 0 and _estimate_vmem(t, N, Dp) <= budget:
            return t
    return 8


def ntxent_loss(zis, zjs, *, batch_size, temperature, use_cosine_similarity):
    assert zis.shape == zjs.shape and zis.shape[0] == batch_size
    B, D = zjs.shape
    # TODO(synk): batch sizes that are not multiples of 8 would need row padding +
    # validity masking to satisfy TPU sublane tiling; not implemented here.
    assert B % 8 == 0, "batch_size must be a multiple of 8 for this kernel"
    N = 2 * B

    # ---- one-time prep in plain JAX (fused by XLA, runs once per call) ------
    reps = jnp.concatenate([zjs, zis], axis=0).astype(jnp.float32)   # (2B, D)
    if use_cosine_similarity:
        nrm = jnp.sqrt(jnp.sum(reps * reps, axis=-1, keepdims=True))
        reps = reps / jnp.maximum(nrm, jnp.float32(1e-8))
    # Fold sqrt(1/T) into both sides so the matmul directly yields sim / T.
    reps = reps * jnp.float32((1.0 / float(temperature)) ** 0.5)
    Dp = max(128, ((D + 127) // 128) * 128)          # lane-pad D; zero cols are inert
    if Dp != D:
        reps = jnp.pad(reps, ((0, 0), (0, Dp - D)))
    reps_bf = reps.astype(jnp.bfloat16)              # (2B, Dp) — Q / partner tiles
    reps_t = reps_bf.T                               # (Dp, 2B) — resident MXU RHS

    cap = _vmem_capacity_bytes()
    tq = _pick_tile(B, N, Dp, int(0.7 * cap))
    nhalf = B // tq
    nblocks = N // tq
    vmem_limit = int(min(int(0.8 * cap), max(_estimate_vmem(tq, N, Dp), 32 << 20)))

    kernel = functools.partial(_ntxent_kernel, batch_size=B, tq=tq)

    out = pl.pallas_call(
        kernel,
        out_shape=jax.ShapeDtypeStruct((1, 1), jnp.float32),
        grid_spec=pltpu.PrefetchScalarGridSpec(
            num_scalar_prefetch=0,
            grid=(nblocks,),
            in_specs=[
                # Q row tile (streamed, double-buffered)
                pl.BlockSpec((tq, Dp), lambda i: (i, 0)),
                # positive-partner tile: other half, same offset within the half
                pl.BlockSpec((tq, Dp), lambda i: ((i + nhalf) % nblocks, 0)),
                # transposed reps, whole-array resident in VMEM
                pl.BlockSpec(memory_space=pltpu.MemorySpace.VMEM),
            ],
            out_specs=pl.BlockSpec(memory_space=pltpu.MemorySpace.SMEM),
            scratch_shapes=[pltpu.SMEM((1,), jnp.float32)],   # running loss sum
        ),
        compiler_params=pltpu.CompilerParams(
            # TODO(synk): restructure to per-block partial-sum outputs + "parallel"
            # to use both v7x TensorCores; kept sequential scalar accumulation here
            # for cross-generation robustness.
            dimension_semantics=("arbitrary",),
            vmem_limit_bytes=vmem_limit,
        ),
    )(reps_bf, reps_bf, reps_t)
    return out[0, 0]


def _reference(zis, zjs, *, batch_size, temperature, use_cosine_similarity):
    """Pure-JAX f32 reference mirroring the PyTorch forward (eager only)."""
    B = batch_size
    N = 2 * B
    reps = jnp.concatenate([zjs, zis], axis=0).astype(jnp.float32)
    if use_cosine_similarity:
        nrm = jnp.sqrt(jnp.sum(reps * reps, axis=-1, keepdims=True))
        r = reps / jnp.maximum(nrm, 1e-8)
        sim = r @ r.T
    else:
        sim = reps @ reps.T
    l_pos = jnp.diagonal(sim, offset=B)
    r_pos = jnp.diagonal(sim, offset=-B)
    positives = jnp.concatenate([l_pos, r_pos]).reshape(N, 1)
    eye = jnp.eye(N, dtype=bool)
    off = jnp.eye(N, k=B, dtype=bool) | jnp.eye(N, k=-B, dtype=bool)
    mask = ~(eye | off)
    negatives = sim[mask].reshape(N, N - 2)
    logits = jnp.concatenate([positives, negatives], axis=1) / temperature
    # cross entropy, labels all 0, reduction='sum'
    m = jnp.max(logits, axis=-1)
    lse = m + jnp.log(jnp.sum(jnp.exp(logits - m[:, None]), axis=-1))
    loss = jnp.sum(lse - logits[:, 0])
    return loss / N


if __name__ == "__main__":
    batch_size = 16
    feat_dim = 32
    temperature = 0.5

    key = jax.random.PRNGKey(0)
    k1, k2 = jax.random.split(key)
    zis = jax.random.normal(k1, (batch_size, feat_dim), dtype=jnp.float32)
    zjs = jax.random.normal(k2, (batch_size, feat_dim), dtype=jnp.float32)

    loss_fn = jax.jit(
        ntxent_loss,
        static_argnames=("batch_size", "temperature", "use_cosine_similarity"),
    )

    for use_cos in (True, False):
        loss = loss_fn(
            zis, zjs,
            batch_size=batch_size,
            temperature=temperature,
            use_cosine_similarity=use_cos,
        )
        loss = jax.block_until_ready(loss)
        ref = _reference(
            zis, zjs,
            batch_size=batch_size,
            temperature=temperature,
            use_cosine_similarity=use_cos,
        )
        assert bool(jnp.isfinite(loss)), (use_cos, loss)
        # bf16 MXU operands -> small numerical drift vs the f32 reference
        assert jnp.allclose(loss, ref, rtol=5e-2, atol=5e-2), (use_cos, loss, ref)

    print("KERNEL_OK")
</pallas_src>

<mosaic_0001>
module attributes {stable_mosaic.version = 11 : i64} {
  func.func @_ntxent_kernel(%arg0: i32, %arg1: memref<16x128xbf16, #tpu.memory_space<vmem>>, %arg2: memref<16x128xbf16, #tpu.memory_space<vmem>>, %arg3: memref<128x32xbf16, #tpu.memory_space<vmem>>, %arg4: memref<1x1xf32, #tpu.memory_space<smem>>, %arg5: memref<1xf32, #tpu.memory_space<smem>>) attributes {dimension_semantics = [#tpu.dimension_semantics<arbitrary>], iteration_bounds = array<i64: 2>, scalar_prefetch = 0 : i64, scratch_operands = 1 : i64, tpu.core_type = #tpu.core_type<tc>, window_params = [{transform_indices = @transform_0, window_bounds = array<i64: 16, 128>}, {transform_indices = @transform_1, window_bounds = array<i64: 16, 128>}, {pipeline_mode = #tpu.pipeline_mode<synchronous>, transform_indices = @transform_2, window_bounds = array<i64: 128, 32>}, {transform_indices = @transform_3, window_bounds = array<i64: 1, 1>}]} {
    %c16_i32 = arith.constant 16 : i32
    %0 = arith.muli %arg0, %c16_i32 : i32
    %c0_i32 = arith.constant 0 : i32
    %1 = arith.cmpi eq, %arg0, %c0_i32 : i32
    %2 = arith.extui %1 : i1 to i32
    %c0_i32_0 = arith.constant 0 : i32
    %3 = arith.cmpi ne, %2, %c0_i32_0 : i32
    scf.if %3 {
      %cst_14 = arith.constant 0.000000e+00 : f32
      %c0_15 = arith.constant 0 : index
      %41 = memref.load %arg5[%c0_15] : memref<1xf32, #tpu.memory_space<smem>>
      memref.store %cst_14, %arg5[%c0_15] : memref<1xf32, #tpu.memory_space<smem>>
    } else {
    }
    %c0 = arith.constant 0 : index
    %c0_1 = arith.constant 0 : index
    %4 = vector.load %arg1[%c0, %c0_1] : memref<16x128xbf16, #tpu.memory_space<vmem>>, vector<16x128xbf16>
    %c0_2 = arith.constant 0 : index
    %c0_3 = arith.constant 0 : index
    %5 = vector.load %arg2[%c0_2, %c0_3] : memref<16x128xbf16, #tpu.memory_space<vmem>>, vector<16x128xbf16>
    %c0_4 = arith.constant 0 : index
    %c0_5 = arith.constant 0 : index
    %6 = vector.load %arg3[%c0_4, %c0_5] : memref<128x32xbf16, #tpu.memory_space<vmem>>, vector<128x32xbf16>
    %cst = arith.constant dense<0.000000e+00> : vector<16x32xf32>
    %7 = tpu.matmul %4, %6, %cst {dimension_numbers = #tpu.dot_dimension_numbers<[1], [0], [0], [1], [0, 0, 1, 1], [], []>} : vector<16x128xbf16>, vector<128x32xbf16>, vector<16x32xf32> -> vector<16x32xf32>
    %8 = arith.extf %4 : vector<16x128xbf16> to vector<16x128xf32>
    %9 = arith.extf %5 : vector<16x128xbf16> to vector<16x128xf32>
    %10 = arith.mulf %8, %9 : vector<16x128xf32>
    %cst_6 = arith.constant dense<0.000000e+00> : vector<16xf32>
    %11 = vector.multi_reduction <add>, %10, %cst_6 [1] : vector<16x128xf32> to vector<16xf32>
    %12 = vector.shape_cast %11 : vector<16xf32> to vector<16x1xf32>
    %13 = tpu.iota {dimensions = array<i32: 0>} : vector<16x1xi32>
    %14 = vector.broadcast %0 : i32 to vector<16x1xi32>
    %15 = arith.addi %14, %13 : vector<16x1xi32>
    %16 = tpu.iota {dimensions = array<i32: 1>} : vector<16x32xi32>
    %17 = vector.broadcast %15 : vector<16x1xi32> to vector<16x32xi32>
    %18 = arith.cmpi eq, %16, %17 : vector<16x32xi32>
    %cst_7 = arith.constant -1.000000e+30 : f32
    %19 = vector.broadcast %cst_7 : f32 to vector<16x32xf32>
    %20 = arith.select %18, %19, %7 : vector<16x32xi1>, vector<16x32xf32>
    %cst_8 = arith.constant dense<0xFF800000> : vector<16xf32>
    %21 = vector.multi_reduction <maximumf>, %20, %cst_8 [1] : vector<16x32xf32> to vector<16xf32>
    %22 = vector.shape_cast %21 : vector<16xf32> to vector<16x1xf32>
    %23 = vector.broadcast %22 : vector<16x1xf32> to vector<16x32xf32>
    %24 = arith.subf %20, %23 : vector<16x32xf32>
    %25 = math.exp %24 : vector<16x32xf32>
    %cst_9 = arith.constant dense<0.000000e+00> : vector<16xf32>
    %26 = vector.multi_reduction <add>, %25, %cst_9 [1] : vector<16x32xf32> to vector<16xf32>
    %27 = vector.shape_cast %26 : vector<16xf32> to vector<16x1xf32>
    %28 = math.log %27 : vector<16x1xf32>
    %29 = arith.addf %22, %28 : vector<16x1xf32>
    %c0_10 = arith.constant 0 : index
    %30 = memref.load %arg5[%c0_10] : memref<1xf32, #tpu.memory_space<smem>>
    %31 = arith.subf %29, %12 : vector<16x1xf32>
    %32 = vector.shape_cast %31 : vector<16x1xf32> to vector<1x16x1xf32>
    %cst_11 = arith.constant dense<0.000000e+00> : vector<1xf32>
    %33 = vector.multi_reduction <add>, %32, %cst_11 [1, 2] : vector<1x16x1xf32> to vector<1xf32>
    %34 = vector.shape_cast %33 : vector<1xf32> to vector<1x1x1xf32>
    %35 = vector.extract %34[0, 0, 0] : f32 from vector<1x1x1xf32>
    %36 = arith.addf %30, %35 : f32
    %c0_12 = arith.constant 0 : index
    %37 = memref.load %arg5[%c0_12] : memref<1xf32, #tpu.memory_space<smem>>
    memref.store %36, %arg5[%c0_12] : memref<1xf32, #tpu.memory_space<smem>>
    %c1_i32 = arith.constant 1 : i32
    %38 = arith.cmpi eq, %arg0, %c1_i32 : i32
    %39 = arith.extui %38 : i1 to i32
    %c0_i32_13 = arith.constant 0 : i32
    %40 = arith.cmpi ne, %39, %c0_i32_13 : i32
    scf.if %40 {
      %c0_14 = arith.constant 0 : index
      %41 = memref.load %arg5[%c0_14] : memref<1xf32, #tpu.memory_space<smem>>
      %cst_15 = arith.constant 3.200000e+01 : f32
      %42 = arith.divf %41, %cst_15 : f32
      %c0_16 = arith.constant 0 : index
      %c0_17 = arith.constant 0 : index
      %43 = memref.load %arg4[%c0_16, %c0_17] : memref<1x1xf32, #tpu.memory_space<smem>>
      memref.store %42, %arg4[%c0_16, %c0_17] : memref<1x1xf32, #tpu.memory_space<smem>>
    } else {
    }
    return
  }
  func.func @transform_0(%arg0: i32) -> (i32, i32) {
    %c0_i32 = arith.constant 0 : i32
    %c0_i32_0 = arith.constant 0 : i32
    return %arg0, %c0_i32 : i32, i32
  }
  func.func @transform_1(%arg0: i32) -> (i32, i32) {
    %c1_i32 = arith.constant 1 : i32
    %0 = arith.addi %arg0, %c1_i32 : i32
    %c2_i32 = arith.constant 2 : i32
    %c0_i32 = arith.constant 0 : i32
    %1 = arith.cmpi eq, %c2_i32, %c0_i32 : i32
    %c1_i32_0 = arith.constant 1 : i32
    %2 = arith.select %1, %c1_i32_0, %c2_i32 : i32
    %3 = arith.remsi %0, %2 : i32
    %c0_i32_1 = arith.constant 0 : i32
    %4 = arith.cmpi ne, %3, %c0_i32_1 : i32
    %c0_i32_2 = arith.constant 0 : i32
    %5 = arith.cmpi slt, %3, %c0_i32_2 : i32
    %c0_i32_3 = arith.constant 0 : i32
    %6 = arith.cmpi slt, %2, %c0_i32_3 : i32
    %7 = arith.xori %5, %6 : i1
    %8 = arith.andi %7, %4 : i1
    %9 = arith.addi %3, %2 : i32
    %10 = arith.select %8, %9, %3 : i32
    %c0_i32_4 = arith.constant 0 : i32
    %c0_i32_5 = arith.constant 0 : i32
    return %10, %c0_i32_4 : i32, i32
  }
  func.func @transform_2(%arg0: i32) -> (i32, i32) {
    %c0_i32 = arith.constant 0 : i32
    %c0_i32_0 = arith.constant 0 : i32
    %c0_i32_1 = arith.constant 0 : i32
    return %c0_i32, %c0_i32_0 : i32, i32
  }
  func.func @transform_3(%arg0: i32) -> (i32, i32) {
    %c0_i32 = arith.constant 0 : i32
    %c0_i32_0 = arith.constant 0 : i32
    %c0_i32_1 = arith.constant 0 : i32
    return %c0_i32, %c0_i32_0 : i32, i32
  }
}

</mosaic_0001>

<llo_original>
// kernel: ntxent_loss.1
$region0: #{ntxent_loss.1}
  #allocation0 [shape = 'u32[]', space=smem, size = 0x4, offset = 0x4, fixed_abs, tag = 'smem constant byte address 0x4 - core index']
  #allocation1 [shape = 'u32[144,128]{1,0:T(1,128)}', space=vmem, size = 0x12000, scoped, tag = 'internal scratch']
  #allocation2 [shape = 'f32[1]{0:T(128)}', space=smem, size = 0x200, scoped, tag = 'scratch operand']
  %s0 = inlined_call_operand.vmem [shape: bf16[32,128], index: 0, kind: input, shape index: {}, may-alias: {0,1}]
  %s1 = inlined_call_operand.vmem [shape: bf16[32,128], index: 1, kind: input, shape index: {}, may-alias: {0,1}]
  %s2 = inlined_call_operand.vmem [shape: bf16[128,32], index: 2, kind: input, shape index: {}]
  %s3 = inlined_call_operand.hbm [shape: f32[1,1], index: 3, kind: output, shape index: {}]
  %s4 = sld [smem:[#allocation0]]
  $region53: #{ntxent_loss.1} parent=0
    _
  %s6 = ssub.s32 1, %s4
  %s7 = scalar_select 0, %s6, %s4
  $region1: #{ntxent_loss.1} parent=0
    #allocation3 [shape = 'u8[512]{0}', space=smem, size = 0x200, scoped, tag = 'output window, operand 0, single buffered']
    #allocation4 [shape = 's32[2]{0}', space=sflag, size = 0x8, scoped, tag = 'scoped memory for ntxent_loss.1']
    %8 = vsyncpa [#allocation4], 0
    loop: start=0, step=1, limit=4
    $region2: #{ntxent_loss.1} parent=1 // loop_pre_header
      _
    $region3: #{ntxent_loss.1} parent=1 // loop_header
      %s10 = sphi 0, %s14
      %p11 = scmp.ge.s32.totalorder %s10, 4
      %s20 = sphi 0, %s22
      %s23 = sphi 0, %s20
      %s24 = sphi 0, %s23
      %s40 = sphi 0, %s24
      %s72 = sphi 0, %s74
      %s75 = sphi 0, %s72
      %s76 = sphi 0, %s75
      %s92 = sphi 0, %s76
      %s96 = sphi 0, %s96
      %s98 = sphi 0, %s96
      %s99 = sphi 0, %s98
      %s113 = sphi 0, %s99
      %s117 = sphi 0, %s117
      %s119 = sphi 0, %s117
      %s120 = sphi 0, %s119
      %s134 = sphi 0, %s120
    $region4: #{ntxent_loss.1} parent=1 // loop_header_branch
      %13 = sbr.rel (%p11) target = $region8
    $region5: #{ntxent_loss.1} parent=1 // loop_body
      %s15 = ssub.s32 %s10, 1
      %s16 = ssub.s32 %s10, 2
      %s17 = sadd.s32 %s10, 1
      %s18 = ssub.s32 %s10, %s17
      %p19 = scmp.eq.s32.totalorder %s18, 0
      %s21 = sadd.s32 %s20, 1
      %s22 = scalar_select %p19, %s20, %s21
      %p25 = pneg %p19
      %p26 = scmp.eq.s32.totalorder %s10, 1
      %p27 = por %p25, %p26
      %p28 = scmp.ne.s32.totalorder %s20, %s23
      %p29 = scmp.eq.s32.totalorder %s10, 0
      %p30 = por %p28, %p29
      %p31 = scmp.ne.s32.totalorder %s20, %s23
      %p32 = scmp.eq.s32.totalorder %s15, 1
      %p33 = por %p31, %p32
      %p34 = scmp.ne.s32.totalorder %s23, %s24
      %p35 = scmp.eq.s32.totalorder %s15, 0
      %p36 = por %p34, %p35
      %p37 = scmp.ne.s32.totalorder %s23, %s24
      %p38 = scmp.eq.s32.totalorder %s16, 1
      %p39 = por %p37, %p38
      %p41 = scmp.ne.s32.totalorder %s24, %s40
      %p42 = scmp.eq.s32.totalorder %s16, 0
      %p43 = por %p41, %p42
      %s44 = sadd.s32 %s10, 1
      %p45 = scmp.lt.s32.totalorder %s44, 0
      %s46 = ssub.s32 0, %s44
      %s47 = scalar_select %p45, %s46, %s44
      %s48 = sand.u32 %s47, 1
      %s49 = ssub.s32 0, %s48
      %s50 = scalar_select %p45, %s49, %s48
      %p51 = scmp.ne.s32.totalorder %s50, 0
      %p52 = scmp.lt.s32.totalorder %s50, 0
      %p53 = pnand %p52, %p51
      %p54 = pneg %p53
      %s55 = sadd.s32 %s50, 2
      %s56 = scalar_select %p54, %s55, %s50
      %s57 = sadd.s32 %s17, 1
      %p58 = scmp.lt.s32.totalorder %s57, 0
      %s59 = ssub.s32 0, %s57
      %s60 = scalar_select %p58, %s59, %s57
      %s61 = sand.u32 %s60, 1
      %s62 = ssub.s32 0, %s61
      %s63 = scalar_select %p58, %s62, %s61
      %p64 = scmp.ne.s32.totalorder %s63, 0
      %p65 = scmp.lt.s32.totalorder %s63, 0
      %p66 = pnand %p65, %p64
      %p67 = pneg %p66
      %s68 = sadd.s32 %s63, 2
      %s69 = scalar_select %p67, %s68, %s63
      %s70 = ssub.s32 %s56, %s69
      %p71 = scmp.eq.s32.totalorder %s70, 0
      %s73 = sadd.s32 %s72, 1
      %s74 = scalar_select %p71, %s72, %s73
      %p77 = pneg %p71
      %p78 = scmp.eq.s32.totalorder %s10, 1
      %p79 = por %p77, %p78
      %p80 = scmp.ne.s32.totalorder %s72, %s75
      %p81 = scmp.eq.s32.totalorder %s10, 0
      %p82 = por %p80, %p81
      %p83 = scmp.ne.s32.totalorder %s72, %s75
      %p84 = scmp.eq.s32.totalorder %s15, 1
      %p85 = por %p83, %p84
      %p86 = scmp.ne.s32.totalorder %s75, %s76
      %p87 = scmp.eq.s32.totalorder %s15, 0
      %p88 = por %p86, %p87
      %p89 = scmp.ne.s32.totalorder %s75, %s76
      %p90 = scmp.eq.s32.totalorder %s16, 1
      %p91 = por %p89, %p90
      %p93 = scmp.ne.s32.totalorder %s76, %s92
      %p94 = scmp.eq.s32.totalorder %s16, 0
      %p95 = por %p93, %p94
      %s97 = sadd.s32 %s96, 1
      %p100 = scmp.eq.s32.totalorder %s10, 1
      %p101 = scmp.ne.s32.totalorder %s96, %s98
      %p102 = scmp.eq.s32.totalorder %s10, 0
      %p103 = por %p101, %p102
      %p104 = scmp.ne.s32.totalorder %s96, %s98
      %p105 = scmp.eq.s32.totalorder %s15, 1
      %p106 = por %p104, %p105
      %p107 = scmp.ne.s32.totalorder %s98, %s99
      %p108 = scmp.eq.s32.totalorder %s15, 0
      %p109 = por %p107, %p108
      %p110 = scmp.ne.s32.totalorder %s98, %s99
      %p111 = scmp.eq.s32.totalorder %s16, 1
      %p112 = por %p110, %p111
      %p114 = scmp.ne.s32.totalorder %s99, %s113
      %p115 = scmp.eq.s32.totalorder %s16, 0
      %p116 = por %p114, %p115
      %s118 = sadd.s32 %s117, 1
      %p121 = scmp.eq.s32.totalorder %s10, 1
      %p122 = scmp.ne.s32.totalorder %s117, %s119
      %p123 = scmp.eq.s32.totalorder %s10, 0
      %p124 = por %p122, %p123
      %p125 = scmp.ne.s32.totalorder %s117, %s119
      %p126 = scmp.eq.s32.totalorder %s15, 1
      %p127 = por %p125, %p126
      %p128 = scmp.ne.s32.totalorder %s119, %s120
      %p129 = scmp.eq.s32.totalorder %s15, 0
      %p130 = por %p128, %p129
      %p131 = scmp.ne.s32.totalorder %s119, %s120
      %p132 = scmp.eq.s32.totalorder %s16, 1
      %p133 = por %p131, %p132
      %p135 = scmp.ne.s32.totalorder %s120, %s134
      %p136 = scmp.eq.s32.totalorder %s16, 0
      %p137 = por %p135, %p136
      %p138 = scmp.le.s32.totalorder 1, %s10
      %p139 = scmp.lt.s32.totalorder %s10, 3
      %p140 = pnand %p138, %p139
      %p141 = pneg %p140
      // Predicated region
      $region9: #{ntxent_loss.1} parent=5 // pred_check
        _
      $region10: #{ntxent_loss.1} parent=5 // pred_check_branch
        %143 = sbr.rel (%p140) target = $region12
      $region11: #{ntxent_loss.1} parent=5 // pred_region
        %s144 = ssub.s32 %s10, 1
        // Predicated region
        $region13: #{ntxent_loss.1} parent=11 // pred_check
          %p145 = pneg %p109
        $region14: #{ntxent_loss.1} parent=11 // pred_check_branch
          %147 = sbr.rel (%p145) target = $region16
        $region15: #{ntxent_loss.1} parent=11 // pred_region
          _
        $region16: #{ntxent_loss.1} parent=11 // pred_fallthru
          _
      $region12: #{ntxent_loss.1} parent=5 // pred_fallthru
        _
      %p148 = scmp.lt.s32.totalorder %s10, 2
      // Predicated region
      $region17: #{ntxent_loss.1} parent=5 // pred_check
        %p149 = pneg %p148
      $region18: #{ntxent_loss.1} parent=5 // pred_check_branch
        %151 = sbr.rel (%p149) target = $region20
      $region19: #{ntxent_loss.1} parent=5 // pred_region
        // Predicated region
        $region21: #{ntxent_loss.1} parent=19 // pred_check
          %p152 = pneg %p30
        $region22: #{ntxent_loss.1} parent=19 // pred_check_branch
          %154 = sbr.rel (%p152) target = $region24
        $region23: #{ntxent_loss.1} parent=19 // pred_region
          %s155 = smul.u32 2, %s10
          %p156 = scmp.lt.s32.totalorder %s155, 3
          %s157 = scalar_select %p156, %s155, 3
          %s158 = smul.addr %s157, 4
          %s159 = scalar_lea.vmem %s0, %s158
          %s160 = smul.u32 2, %s10
        $region24: #{ntxent_loss.1} parent=19 // pred_fallthru
          _
        // Predicated region
        $region25: #{ntxent_loss.1} parent=19 // pred_check
          %p161 = pneg %p82
        $region26: #{ntxent_loss.1} parent=19 // pred_check_branch
          %163 = sbr.rel (%p161) target = $region28
        $region27: #{ntxent_loss.1} parent=19 // pred_region
          %s164 = sadd.s32 %s10, 1
          %p165 = scmp.lt.s32.totalorder %s164, 0
          %s166 = ssub.s32 0, %s164
          %s167 = scalar_select %p165, %s166, %s164
          %s168 = sand.u32 %s167, 1
          %s169 = ssub.s32 0, %s168
          %s170 = scalar_select %p165, %s169, %s168
          %p171 = scmp.ne.s32.totalorder %s170, 0
          %p172 = scmp.lt.s32.totalorder %s170, 0
          %p173 = pnand %p172, %p171
          %p174 = pneg %p173
          %s175 = sadd.s32 %s170, 2
          %s176 = scalar_select %p174, %s175, %s170
          %s177 = smul.u32 2, %s176
          %p178 = scmp.lt.s32.totalorder %s177, 3
          %s179 = scalar_select %p178, %s177, 3
          %s180 = smul.addr %s179, 4
          %s181 = scalar_lea.vmem %s1, %s180
          %s182 = sadd.s32 %s10, 1
          %p183 = scmp.lt.s32.totalorder %s182, 0
          %s184 = ssub.s32 0, %s182
          %s185 = scalar_select %p183, %s184, %s182
          %s186 = sand.u32 %s185, 1
          %s187 = ssub.s32 0, %s186
          %s188 = scalar_select %p183, %s187, %s186
          %p189 = scmp.ne.s32.totalorder %s188, 0
          %p190 = scmp.lt.s32.totalorder %s188, 0
          %p191 = pnand %p190, %p189
          %p192 = pneg %p191
          %s193 = sadd.s32 %s188, 2
          %s194 = scalar_select %p192, %s193, %s188
          %s195 = smul.u32 2, %s194
        $region28: #{ntxent_loss.1} parent=19 // pred_fallthru
          _
      $region20: #{ntxent_loss.1} parent=5 // pred_fallthru
        _
      %p196 = scmp.le.s32.totalorder 1, %s10
      %p197 = scmp.lt.s32.totalorder %s10, 3
      %p198 = pnand %p196, %p197
      %p199 = pneg %p198
      // Predicated region
      $region29: #{ntxent_loss.1} parent=5 // pred_check
        _
      $region30: #{ntxent_loss.1} parent=5 // pred_check_branch
        %201 = sbr.rel (%p198) target = $region32
      $region31: #{ntxent_loss.1} parent=5 // pred_region
        %s202 = ssub.s32 %s10, 1
        %s203 = smul.u32 2, %s15
        %p204 = scmp.lt.s32.totalorder %s203, 3
        %s205 = scalar_select %p204, %s203, 3
        %s206 = smul.addr %s205, 4
        %s207 = scalar_lea.vmem %s0, %s206
        %p208 = pneg %p36
        %p209 = pneg %p33
        %s210 = sadd.s32 %s15, 1
        %p211 = scmp.lt.s32.totalorder %s210, 0
        %s212 = ssub.s32 0, %s210
        %s213 = scalar_select %p211, %s212, %s210
        %s214 = sand.u32 %s213, 1
        %s215 = ssub.s32 0, %s214
        %s216 = scalar_select %p211, %s215, %s214
        %p217 = scmp.ne.s32.totalorder %s216, 0
        %p218 = scmp.lt.s32.totalorder %s216, 0
        %p219 = pnand %p218, %p217
        %p220 = pneg %p219
        %s221 = sadd.s32 %s216, 2
        %s222 = scalar_select %p220, %s221, %s216
        %s223 = smul.u32 2, %s222
        %p224 = scmp.lt.s32.totalorder %s223, 3
        %s225 = scalar_select %p224, %s223, 3
        %s226 = smul.addr %s225, 4
        %s227 = scalar_lea.vmem %s1, %s226
        %p228 = pneg %p88
        %p229 = pneg %p85
        %p230 = pneg %p109
        %p231 = pneg %p106
        %p232 = pneg %p130
        %p233 = pneg %p127
        %s234 = smul.u32 2, %s15
        %p235 = scmp.lt.s32.totalorder %s234, 3
        %s236 = scalar_select %p235, %s234, 3
        %s237 = smul.addr %s236, 4
        %s238 = scalar_lea.vmem %s0, %s237
        %s239 = smul.u32 2, %s15
        %s240 = sadd.s32 %s15, 1
        %p241 = scmp.lt.s32.totalorder %s240, 0
        %s242 = ssub.s32 0, %s240
        %s243 = scalar_select %p241, %s242, %s240
        %s244 = sand.u32 %s243, 1
        %s245 = ssub.s32 0, %s244
        %s246 = scalar_select %p241, %s245, %s244
        %p247 = scmp.ne.s32.totalorder %s246, 0
        %p248 = scmp.lt.s32.totalorder %s246, 0
        %p249 = pnand %p248, %p247
        %p250 = pneg %p249
        %s251 = sadd.s32 %s246, 2
        %s252 = scalar_select %p250, %s251, %s246
        %s253 = smul.u32 2, %s252
        %p254 = scmp.lt.s32.totalorder %s253, 3
        %s255 = scalar_select %p254, %s253, 3
        %s256 = smul.addr %s255, 4
        %s257 = scalar_lea.vmem %s1, %s256
        %s258 = sadd.s32 %s15, 1
        %p259 = scmp.lt.s32.totalorder %s258, 0
        %s260 = ssub.s32 0, %s258
        %s261 = scalar_select %p259, %s260, %s258
        %s262 = sand.u32 %s261, 1
        %s263 = ssub.s32 0, %s262
        %s264 = scalar_select %p259, %s263, %s262
        %p265 = scmp.ne.s32.totalorder %s264, 0
        %p266 = scmp.lt.s32.totalorder %s264, 0
        %p267 = pnand %p266, %p265
        %p268 = pneg %p267
        %s269 = sadd.s32 %s264, 2
        %s270 = scalar_select %p268, %s269, %s264
        %s271 = smul.u32 2, %s270
        %s273 = smul.u32 %s15, 16
        %p274 = scmp.eq.s32.totalorder %s15, 0
        // Predicated region
        $region33: #{ntxent_loss.1} parent=31 // pred_check
          %p275 = pneg %p274
        $region34: #{ntxent_loss.1} parent=31 // pred_check_branch
          %277 = sbr.rel (%p275) target = $region36
        $region35: #{ntxent_loss.1} parent=31 // pred_region
          %s278 = scalar_lea.smem [#allocation2], 0
          %279 = sst [smem:[%s278]] 0.0
        $region36: #{ntxent_loss.1} parent=31 // pred_fallthru
          _
        %v280 = vld [vmem:[%s238] sm:$0xf]
        %v281 = vld [vmem:[%s238 + $0x4] sm:$0xf]
        %v282 = vld [vmem:[%s257] sm:$0xf]
        %v283 = vld [vmem:[%s257 + $0x4] sm:$0xf]
        %v284 = vld [vmem:[%s2] sm:$0xf]
        %v285 = vld [vmem:[%s2 + $0x4] sm:$0xf]
        %v286 = vld [vmem:[%s2 + $0x8] sm:$0xf]
        %v287 = vld [vmem:[%s2 + $0xc] sm:$0xf]
        %v288 = vld [vmem:[%s2 + $0x10] sm:$0xf]
        %v289 = vld [vmem:[%s2 + $0x14] sm:$0xf]
        %v290 = vld [vmem:[%s2 + $0x18] sm:$0xf]
        %v291 = vld [vmem:[%s2 + $0x1c] sm:$0xf]
        %v292 = vld [vmem:[%s2 + $0x20] sm:$0xf]
        %v293 = vld [vmem:[%s2 + $0x24] sm:$0xf]
        %v294 = vld [vmem:[%s2 + $0x28] sm:$0xf]
        %v295 = vld [vmem:[%s2 + $0x2c] sm:$0xf]
        %v296 = vld [vmem:[%s2 + $0x30] sm:$0xf]
        %v297 = vld [vmem:[%s2 + $0x34] sm:$0xf]
        %v298 = vld [vmem:[%s2 + $0x38] sm:$0xf]
        %v299 = vld [vmem:[%s2 + $0x3c] sm:$0xf]
        %v302 = vunpack.c.l.b16 %v280
        %v303 = vunpack.c.l.b16 %v281
        %v304 = vpack.c.b16 %v303, %v302
        %v322 = vunpack.c.l.b16 %v284
        %v323 = vunpack.c.l.b16 %v285
        %v324 = vunpack.c.l.b16 %v286
        %v325 = vunpack.c.l.b16 %v287
        %v326 = vunpack.c.l.b16 %v288
        %v327 = vunpack.c.l.b16 %v289
        %v328 = vunpack.c.l.b16 %v290
        %v329 = vunpack.c.l.b16 %v291
        %v330 = vunpack.c.l.b16 %v292
        %v331 = vunpack.c.l.b16 %v293
        %v332 = vunpack.c.l.b16 %v294
        %v333 = vunpack.c.l.b16 %v295
        %v334 = vunpack.c.l.b16 %v296
        %v335 = vunpack.c.l.b16 %v297
        %v336 = vunpack.c.l.b16 %v298
        %v337 = vunpack.c.l.b16 %v299
        %v338 = vpack.c.b16 %v323, %v322
        %v339 = vpack.c.b16 %v325, %v324
        %v340 = vpack.c.b16 %v327, %v326
        %v341 = vpack.c.b16 %v329, %v328
        %v342 = vpack.c.b16 %v331, %v330
        %v343 = vpack.c.b16 %v333, %v332
        %v344 = vpack.c.b16 %v335, %v334
        %v345 = vpack.c.b16 %v337, %v336
        %354 = vmatprep.subr.bf16.mxu0 0
        %355 = vmatpush1.bf16.msra.mxu0 %v345
        %356 = vmatprep.subr.bf16.mxu0 0
        %357 = vmatpush1.bf16.msra.mxu0 %v344
        %358 = vmatprep.subr.bf16.mxu0 0
        %359 = vmatpush1.bf16.msra.mxu0 %v343
        %360 = vmatprep.subr.bf16.mxu0 0
        %361 = vmatpush1.bf16.msra.mxu0 %v342
        %362 = vmatprep.subr.bf16.mxu0 0
        %363 = vmatpush1.bf16.msra.mxu0 %v341
        %364 = vmatprep.subr.bf16.mxu0 0
        %365 = vmatpush1.bf16.msra.mxu0 %v340
        %366 = vmatprep.subr.bf16.mxu0 0
        %367 = vmatpush1.bf16.msra.mxu0 %v339
        %368 = vmatprep.subr.bf16.mxu0 0
        %369 = vmatpush1.bf16.msra.mxu0 %v338
        %370 = vmatprep.subr.bf16.mxu0 0
        %371 = vmatpush2.bf16.msra.mxu0 0
        %372 = vmatprep.subr.bf16.mxu0 0
        %373 = vmatpush2.bf16.msra.mxu0 0
        %374 = vmatprep.subr.bf16.mxu0 0
        %375 = vmatpush2.bf16.msra.mxu0 0
        %376 = vmatprep.subr.bf16.mxu0 0
        %377 = vmatpush2.bf16.msra.mxu0 0
        %378 = vmatprep.subr.bf16.mxu0 0
        %379 = vmatpush2.bf16.msra.mxu0 0
        %380 = vmatprep.subr.bf16.mxu0 0
        %381 = vmatpush2.bf16.msra.mxu0 0
        %382 = vmatprep.subr.bf16.mxu0 0
        %383 = vmatpush2.bf16.msra.mxu0 0
        %384 = vmatprep.subr.bf16.mxu0 0
        %385 = vmatpush2.bf16.msra.mxu0 0
        %386 = vmatprep.mubr.bf16.mxu0 0
        %387 = vmatmul.mubr.bf16.gmra.mxu0 %v304
        %v388 = vpop.f32.mrf.mxu0
        %v389 = vadd.f32 0.0, %v388
        %v390 = vpop.f32.mrf.mxu0
        %v391 = vpop.f32.mrf.mxu0
        %v392 = vadd.f32 0.0, %v391
        %v393 = vpop.f32.mrf.mxu0
        %394 = vdwg.mxu0
        %v395 = vunpack.c.l.bf16 %v280
        %v396 = vunpack.c.l.bf16 %v281
        %v397 = vunpack.c.l.bf16 %v282
        %v398 = vunpack.c.l.bf16 %v283
        %v399 = vmul.f32 %v395, %v397
        %v400 = vmul.f32 %v396, %v398
        %401 = vadd.xlane.f32.xlu0 %v399
        %v402 = vpop.xlane.xlu0 %401
        %403 = vadd.xlane.f32.xlu0 %v400
        %v404 = vpop.xlane.xlu0 %403
        %v405 = vlaneseq
        %v406 = vshrl.u32 %v405, 7
        %v407 = vadd.s32 %v406, 8
        %v408 = vstv %s273
        %v409 = vadd.s32 %v408, %v406
        %v410 = vadd.s32 %v408, %v407
        %v411 = vlaneseq
        %v412 = vand.u32 %v411, 127
        %vm413 = vcmp.eq.s32.totalorder %v412, %v409
        %vm414 = vcmp.eq.s32.totalorder %v412, %v410
        %v415 = vsel %vm413, -1e+30, %v389
        %v416 = vsel %vm414, -1e+30, %v392
        %vm417 = vcmask 261120
        %v418 = vsel %vm417, %v415, -inf
        %419 = vmax.xlane.f32.xlu0 %v418
        %v420 = vpop.xlane.xlu0 %419
        %v421 = vsel %vm417, %v416, -inf
        %422 = vmax.xlane.f32.xlu0 %v421
        %v423 = vpop.xlane.xlu0 %422
        %v424 = vsub.f32 %v415, %v420
        %v425 = vsub.f32 %v416, %v423
        %v426 = vmul.f32 %v424, 1.442695
        %v427 = vpow.pop %v426
        %v428 = vmul.f32 %v425, 1.442695
        %v429 = vpow.pop %v428
        %v430 = vsel %vm417, %v427, 0.0
        %431 = vadd.xlane.f32.xlu0 %v430
        %v432 = vpop.xlane.xlu0 %431
        %v433 = vsel %vm417, %v429, 0.0
        %434 = vadd.xlane.f32.xlu0 %v433
        %v435 = vpop.xlane.xlu0 %434
        %v436 = vlog2.pop %v432
        %v437 = vmul.f32 %v436, 0.6931472
        %v438 = vlog2.pop %v435
        %v439 = vmul.f32 %v438, 0.6931472
        %v440 = vadd.f32 %v420, %v437
        %v441 = vadd.f32 %v423, %v439
        %s442 = sld [smem:[#allocation2]]
        %v443 = vsub.f32 %v440, %v402
        %v444 = vsub.f32 %v441, %v404
        %vm445 = vcmask 7168
        %v446 = vsel %vm445, %v443, 0.0
        %v447 = vsel %vm445, %v444, 0.0
        %v448 = vadd.f32 %v446, %v447
        %449 = vadd.xlane.f32.xlu0 %v448
        %v450 = vpop.xlane.xlu0 %449
        %v451 = vrot.slane %v450, 4
        %v452 = vadd.f32 %v450, %v451
        %v453 = vrot.slane %v452, 2
        %v454 = vadd.f32 %v452, %v453
        %v455 = vrot.slane %v454, 1
        %v456 = vadd.f32 %v454, %v455
        %s457 = vtos %v456
        %s458 = sadd.f32 %s442, %s457
        %s459 = scalar_lea.smem [#allocation2], 0
        %460 = sst [smem:[%s459]] %s458
        %p461 = scmp.eq.s32.totalorder %s15, 1
        // Predicated region
        $region37: #{ntxent_loss.1} parent=31 // pred_check
          %p462 = pneg %p461
        $region38: #{ntxent_loss.1} parent=31 // pred_check_branch
          %464 = sbr.rel (%p462) target = $region40
        $region39: #{ntxent_loss.1} parent=31 // pred_region
          %s465 = sld [smem:[#allocation2]]
          %v466 = vrcp.pop 32.0
          %s467 = vtos %v466
          %s468 = smul.f32 %s465, %s467
          %s469 = scalar_lea.smem [#allocation3], 0
          %470 = sst [smem:[%s469]] %s468
        $region40: #{ntxent_loss.1} parent=31 // pred_fallthru
          _
        // Predicated region
        $region41: #{ntxent_loss.1} parent=31 // pred_check
          %p471 = pneg %p127
        $region42: #{ntxent_loss.1} parent=31 // pred_check_branch
          %473 = sbr.rel (%p471) target = $region44
        $region43: #{ntxent_loss.1} parent=31 // pred_region
          %s475 = ssub.s32 16, 16
          %476 = vsyncadd [#allocation4], %s475
          %479 = dma.smem_to_hbm [#allocation3], 16, %s3, [#allocation4]
        $region44: #{ntxent_loss.1} parent=31 // pred_fallthru
          _
        // Predicated region
        $region45: #{ntxent_loss.1} parent=31 // pred_check
          %p480 = pneg %p127
        $region46: #{ntxent_loss.1} parent=31 // pred_check_branch
          %482 = sbr.rel (%p480) target = $region48
        $region47: #{ntxent_loss.1} parent=31 // pred_region
          %483 = dma.done [#allocation4], 16
        $region48: #{ntxent_loss.1} parent=31 // pred_fallthru
          _
        %484 = sfence
      $region32: #{ntxent_loss.1} parent=5 // pred_fallthru
        _
      %p485 = scmp.le.s32.totalorder 2, %s10
      // Predicated region
      $region49: #{ntxent_loss.1} parent=5 // pred_check
        %p486 = pneg %p485
      $region50: #{ntxent_loss.1} parent=5 // pred_check_branch
        %488 = sbr.rel (%p486) target = $region52
      $region51: #{ntxent_loss.1} parent=5 // pred_region
        %s489 = ssub.s32 %s10, 2
      $region52: #{ntxent_loss.1} parent=5 // pred_fallthru
        _
    $region6: #{ntxent_loss.1} parent=1 // loop_footer
      %s14 = sadd.s32 1, %s10
    $region7: #{ntxent_loss.1} parent=1 // loop_footer_branch
      %9 = sbr.rel target = $region3
    $region8: #{ntxent_loss.1} parent=1 // loop_exit
      _
    %490 = vsyncpa [#allocation4], 1
    %s491 = scalar_lea.sflag [#allocation4], 1
    %492 = vsyncpa %s491, 1

</llo_original>
